<compile_context>
chip_gen: v6e
topology: v6e:2x2x1
jax: 0.10.0
libtpu: 0.0.40
codegen_flags: <defaults>
</compile_context>

<pallas_src>
import functools

import jax
import jax.numpy as jnp
from jax import lax
from jax.experimental import pallas as pl
from jax.experimental.pallas import tpu as pltpu

LANE = 128
SUBLANE = 8
BF16_SUBLANE = 16        # bf16 sublane tile height
_SPLIT_THRESHOLD = 1024  # force >=2 grid steps (v7x megacore) above this batch


def _round_up(n: int, m: int) -> int:
    return ((n + m - 1) // m) * m


def _pad2d(a, rows, cols):
    r, c = a.shape
    return jnp.pad(a, ((0, rows - r), (0, cols - c)))


def actor_kernel(x_ref, w1_ref, b1_ref, w2_ref, b2_ref, w3t_ref, b3t_ref, o_ref):
    # fc1 + ReLU   (MXU bf16 matmul, f32 accumulation; VPU max in f32)
    h1 = jnp.dot(x_ref[...], w1_ref[...], preferred_element_type=jnp.float32)
    h1 = jnp.maximum(h1 + b1_ref[...], 0.0)
    # fc2 + ReLU
    h2 = jnp.dot(h1.astype(jnp.bfloat16), w2_ref[...],
                 preferred_element_type=jnp.float32)
    h2 = jnp.maximum(h2 + b2_ref[...], 0.0)
    # fc3 computed transposed: (A_pad, H2) x (tb, H2)^T -> (A_pad, tb)
    # (contraction on both last dims, flash-attention q@k.T style — no
    #  explicit transpose needed, output lands with batch on lanes)
    h3t = lax.dot_general(w3t_ref[...], h2.astype(jnp.bfloat16),
                          (((1,), (1,)), ((), ())),
                          preferred_element_type=jnp.float32)
    # tanh only on the narrow (A_pad, tb) slab; lane-dense f32 store.
    o_ref[...] = jnp.tanh(h3t + b3t_ref[...])


def prepare_actor_params(params):
    """One-time padding + bf16 cast of the weights (hoisted out of hot path).

    Zero padding is mathematically identical to the original network: padded
    hidden units are ReLU(0)=0, padded action rows are tanh(0)=0 and sliced
    off by the caller.
    """
    w1, b1 = params["w1"], params["b1"]
    w2, b2 = params["w2"], params["b2"]
    w3, b3 = params["w3"], params["b3"]

    S, H1 = w1.shape
    H2 = w2.shape[1]
    A = w3.shape[1]

    Sp = _round_up(S, BF16_SUBLANE)   # 24 -> 32 (bf16 sublane multiple)
    H1p = _round_up(H1, LANE)         # 64 -> 128
    H2p = _round_up(H2, LANE)         # 128 -> 128
    Ap = _round_up(A, SUBLANE)        # 2 -> 8 (one f32 sublane tile)

    return {
        "w1": _pad2d(w1, Sp, H1p).astype(jnp.bfloat16),
        "b1": _pad2d(b1.reshape(1, -1), 1, H1p).astype(jnp.float32),
        "w2": _pad2d(w2, H1p, H2p).astype(jnp.bfloat16),
        "b2": _pad2d(b2.reshape(1, -1), 1, H2p).astype(jnp.float32),
        # fc3 stored pre-transposed: (A_pad, H2p) weights, (A_pad, 1) bias.
        "w3t": _pad2d(w3.T, Ap, H2p).astype(jnp.bfloat16),
        "b3t": _pad2d(b3.reshape(-1, 1), Ap, 1).astype(jnp.float32),
    }


def _pick_tiling(B: int, tile_b: int):
    """Pick (tb, n_steps) minimizing batch padding; keep >=2 steps for v7x
    megacore once the batch is large enough."""
    n = max(1, -(-B // tile_b))                      # ceil(B / tile_b)
    if n == 1 and B >= _SPLIT_THRESHOLD:
        n = 2                                        # let megacore shard it
    if n == 1:
        tb = _round_up(B, SUBLANE)
    else:
        tb = _round_up(-(-B // n), LANE)             # lane-aligned multi-step tile
        n = -(-B // tb)                              # re-derive step count
    return tb, n


@functools.partial(jax.jit, static_argnames=("action_size", "tile_b"))
def actor_forward(x, prepared, *, action_size: int, tile_b: int = 2048):
    """x: (B, state_size) f32; prepared: output of prepare_actor_params.

    Returns (B, action_size) f32 = tanh(relu(relu(x@w1+b1)@w2+b2)@w3+b3).
    """
    w1p, b1p = prepared["w1"], prepared["b1"]
    w2p, b2p = prepared["w2"], prepared["b2"]
    w3tp, b3tp = prepared["w3t"], prepared["b3t"]

    B, S = x.shape
    Sp, H1p = w1p.shape
    H2p = w2p.shape[1]
    Ap = w3tp.shape[0]

    tb, n_steps = _pick_tiling(B, tile_b)
    Bp = tb * n_steps

    # Pad batch to Bp and the K dim to Sp (zero pad == identical math).
    xp = jnp.pad(x, ((0, Bp - B), (0, Sp - S))).astype(jnp.bfloat16)

    resident = lambda i: (0, 0)   # weights/biases: same block every grid step

    out_t = pl.pallas_call(
        actor_kernel,
        out_shape=jax.ShapeDtypeStruct((Ap, Bp), jnp.float32),
        grid=(n_steps,),
        in_specs=[
            pl.BlockSpec((tb, Sp), lambda i: (i, 0)),   # x tile (pipelined)
            pl.BlockSpec((Sp, H1p), resident),          # w1
            pl.BlockSpec((1, H1p), resident),           # b1
            pl.BlockSpec((H1p, H2p), resident),         # w2
            pl.BlockSpec((1, H2p), resident),           # b2
            pl.BlockSpec((Ap, H2p), resident),          # w3^T
            pl.BlockSpec((Ap, 1), resident),            # b3^T
        ],
        out_specs=pl.BlockSpec((Ap, tb), lambda i: (0, i)),  # lane-dense stores
        compiler_params=pltpu.CompilerParams(
            dimension_semantics=("parallel",),          # megacore on v7x
        ),
    )(xp, w1p, b1p, w2p, b2p, w3tp, b3tp)

    # (A_pad, Bp) -> (B, action_size): tiny slice + transpose of a narrow slab.
    return out_t[:action_size, :B].T


def init_actor_params(key, state_size=24, action_size=2, fc1_units=64, fc2_units=128):
    """Deterministic init mirroring the PyTorch module's reset_parameters().

    Note: PyTorch's hidden_init uses weight.size(0) (= out_features) as fan_in,
    which only affects init statistics, not the forward math.
    """
    ks = jax.random.split(key, 6)
    lim1 = 1.0 / jnp.sqrt(float(fc1_units))
    lim2 = 1.0 / jnp.sqrt(float(fc2_units))
    lim3 = 3e-3
    # nn.Linear default bias init: U(-1/sqrt(in_features), 1/sqrt(in_features))
    blim1 = 1.0 / jnp.sqrt(float(state_size))
    blim2 = 1.0 / jnp.sqrt(float(fc1_units))
    blim3 = 1.0 / jnp.sqrt(float(fc2_units))
    return {
        "w1": jax.random.uniform(ks[0], (state_size, fc1_units), jnp.float32, -lim1, lim1),
        "b1": jax.random.uniform(ks[1], (1, fc1_units), jnp.float32, -blim1, blim1),
        "w2": jax.random.uniform(ks[2], (fc1_units, fc2_units), jnp.float32, -lim2, lim2),
        "b2": jax.random.uniform(ks[3], (1, fc2_units), jnp.float32, -blim2, blim2),
        "w3": jax.random.uniform(ks[4], (fc2_units, action_size), jnp.float32, -lim3, lim3),
        "b3": jax.random.uniform(ks[5], (1, action_size), jnp.float32, -blim3, blim3),
    }


if __name__ == "__main__":
    key = jax.random.PRNGKey(0)
    k_params, k_x = jax.random.split(key)

    state_size, action_size = 24, 2
    batch = 8
    params = init_actor_params(k_params, state_size=state_size, action_size=action_size)
    prepared = prepare_actor_params(params)          # one-time pad + bf16 cast
    x = jax.random.normal(k_x, (batch, state_size), dtype=jnp.float32)

    out = actor_forward(x, prepared, action_size=action_size)
    out = jax.block_until_ready(out)

    # Pure-JAX f32 reference check (kernel matmuls run in bf16 -> looser atol).
    h1 = jnp.maximum(x @ params["w1"] + params["b1"], 0.0)
    h2 = jnp.maximum(h1 @ params["w2"] + params["b2"], 0.0)
    ref = jnp.tanh(h2 @ params["w3"] + params["b3"])
    assert out.shape == (batch, action_size)
    assert jnp.allclose(out, ref, atol=2e-2), "mismatch vs reference"

    print("KERNEL_OK")
</pallas_src>

<mosaic_0001>
module attributes {stable_mosaic.version = 11 : i64} {
  func.func @actor_kernel(%arg0: i32, %arg1: memref<8x32xbf16, #tpu.memory_space<vmem>>, %arg2: memref<32x128xbf16, #tpu.memory_space<vmem>>, %arg3: memref<1x128xf32, #tpu.memory_space<vmem>>, %arg4: memref<128x128xbf16, #tpu.memory_space<vmem>>, %arg5: memref<1x128xf32, #tpu.memory_space<vmem>>, %arg6: memref<8x128xbf16, #tpu.memory_space<vmem>>, %arg7: memref<8x1xf32, #tpu.memory_space<vmem>>, %arg8: memref<8x8xf32, #tpu.memory_space<vmem>>) attributes {dimension_semantics = [#tpu.dimension_semantics<parallel>], iteration_bounds = array<i64: 1>, scalar_prefetch = 0 : i64, scratch_operands = 0 : i64, tpu.core_type = #tpu.core_type<tc>, window_params = [{transform_indices = @transform_0, window_bounds = array<i64: 8, 32>}, {pipeline_mode = #tpu.pipeline_mode<synchronous>, transform_indices = @transform_1, window_bounds = array<i64: 32, 128>}, {pipeline_mode = #tpu.pipeline_mode<synchronous>, transform_indices = @transform_2, window_bounds = array<i64: 1, 128>}, {pipeline_mode = #tpu.pipeline_mode<synchronous>, transform_indices = @transform_3, window_bounds = array<i64: 128, 128>}, {pipeline_mode = #tpu.pipeline_mode<synchronous>, transform_indices = @transform_4, window_bounds = array<i64: 1, 128>}, {pipeline_mode = #tpu.pipeline_mode<synchronous>, transform_indices = @transform_5, window_bounds = array<i64: 8, 128>}, {pipeline_mode = #tpu.pipeline_mode<synchronous>, transform_indices = @transform_6, window_bounds = array<i64: 8, 1>}, {transform_indices = @transform_7, window_bounds = array<i64: 8, 8>}]} {
    %c0 = arith.constant 0 : index
    %c0_0 = arith.constant 0 : index
    %0 = vector.load %arg1[%c0, %c0_0] : memref<8x32xbf16, #tpu.memory_space<vmem>>, vector<8x32xbf16>
    %c0_1 = arith.constant 0 : index
    %c0_2 = arith.constant 0 : index
    %1 = vector.load %arg2[%c0_1, %c0_2] : memref<32x128xbf16, #tpu.memory_space<vmem>>, vector<32x128xbf16>
    %cst = arith.constant dense<0.000000e+00> : vector<8x128xf32>
    %2 = tpu.matmul %0, %1, %cst {dimension_numbers = #tpu.dot_dimension_numbers<[1], [0], [0], [1], [0, 0, 1, 1], [], []>} : vector<8x32xbf16>, vector<32x128xbf16>, vector<8x128xf32> -> vector<8x128xf32>
    %c0_3 = arith.constant 0 : index
    %c0_4 = arith.constant 0 : index
    %3 = vector.load %arg3[%c0_3, %c0_4] : memref<1x128xf32, #tpu.memory_space<vmem>>, vector<1x128xf32>
    %4 = vector.broadcast %3 : vector<1x128xf32> to vector<8x128xf32>
    %5 = arith.addf %2, %4 : vector<8x128xf32>
    %cst_5 = arith.constant 0.000000e+00 : f32
    %6 = vector.broadcast %cst_5 : f32 to vector<8x128xf32>
    %7 = arith.maximumf %5, %6 : vector<8x128xf32>
    %8 = arith.truncf %7 : vector<8x128xf32> to vector<8x128xbf16>
    %c0_6 = arith.constant 0 : index
    %c0_7 = arith.constant 0 : index
    %9 = vector.load %arg4[%c0_6, %c0_7] : memref<128x128xbf16, #tpu.memory_space<vmem>>, vector<128x128xbf16>
    %cst_8 = arith.constant dense<0.000000e+00> : vector<8x128xf32>
    %10 = tpu.matmul %8, %9, %cst_8 {dimension_numbers = #tpu.dot_dimension_numbers<[1], [0], [0], [1], [0, 0, 1, 1], [], []>} : vector<8x128xbf16>, vector<128x128xbf16>, vector<8x128xf32> -> vector<8x128xf32>
    %c0_9 = arith.constant 0 : index
    %c0_10 = arith.constant 0 : index
    %11 = vector.load %arg5[%c0_9, %c0_10] : memref<1x128xf32, #tpu.memory_space<vmem>>, vector<1x128xf32>
    %12 = vector.broadcast %11 : vector<1x128xf32> to vector<8x128xf32>
    %13 = arith.addf %10, %12 : vector<8x128xf32>
    %cst_11 = arith.constant 0.000000e+00 : f32
    %14 = vector.broadcast %cst_11 : f32 to vector<8x128xf32>
    %15 = arith.maximumf %13, %14 : vector<8x128xf32>
    %c0_12 = arith.constant 0 : index
    %c0_13 = arith.constant 0 : index
    %16 = vector.load %arg6[%c0_12, %c0_13] : memref<8x128xbf16, #tpu.memory_space<vmem>>, vector<8x128xbf16>
    %17 = arith.truncf %15 : vector<8x128xf32> to vector<8x128xbf16>
    %cst_14 = arith.constant dense<0.000000e+00> : vector<8x8xf32>
    %18 = tpu.matmul %16, %17, %cst_14 {dimension_numbers = #tpu.dot_dimension_numbers<[1], [1], [0], [0], [0, 0, 1, 0], [], []>} : vector<8x128xbf16>, vector<8x128xbf16>, vector<8x8xf32> -> vector<8x8xf32>
    %c0_15 = arith.constant 0 : index
    %c0_16 = arith.constant 0 : index
    %19 = vector.load %arg7[%c0_15, %c0_16] : memref<8x1xf32, #tpu.memory_space<vmem>>, vector<8x1xf32>
    %20 = vector.broadcast %19 : vector<8x1xf32> to vector<8x8xf32>
    %21 = arith.addf %18, %20 : vector<8x8xf32>
    %22 = math.tanh %21 : vector<8x8xf32>
    %c0_17 = arith.constant 0 : index
    %c0_18 = arith.constant 0 : index
    %23 = vector.load %arg8[%c0_17, %c0_18] : memref<8x8xf32, #tpu.memory_space<vmem>>, vector<8x8xf32>
    tpu.vector_store %arg8[%c0_17, %c0_18], %22 {strides = array<i32>} : memref<8x8xf32, #tpu.memory_space<vmem>>, vector<8x8xf32>,
    return
  }
  func.func @transform_0(%arg0: i32) -> (i32, i32) {
    %c0_i32 = arith.constant 0 : i32
    %c0_i32_0 = arith.constant 0 : i32
    return %arg0, %c0_i32 : i32, i32
  }
  func.func @transform_1(%arg0: i32) -> (i32, i32) {
    %c0_i32 = arith.constant 0 : i32
    %c0_i32_0 = arith.constant 0 : i32
    %c0_i32_1 = arith.constant 0 : i32
    return %c0_i32, %c0_i32_0 : i32, i32
  }
  func.func @transform_2(%arg0: i32) -> (i32, i32) {
    %c0_i32 = arith.constant 0 : i32
    %c0_i32_0 = arith.constant 0 : i32
    %c0_i32_1 = arith.constant 0 : i32
    return %c0_i32, %c0_i32_0 : i32, i32
  }
  func.func @transform_3(%arg0: i32) -> (i32, i32) {
    %c0_i32 = arith.constant 0 : i32
    %c0_i32_0 = arith.constant 0 : i32
    %c0_i32_1 = arith.constant 0 : i32
    return %c0_i32, %c0_i32_0 : i32, i32
  }
  func.func @transform_4(%arg0: i32) -> (i32, i32) {
    %c0_i32 = arith.constant 0 : i32
    %c0_i32_0 = arith.constant 0 : i32
    %c0_i32_1 = arith.constant 0 : i32
    return %c0_i32, %c0_i32_0 : i32, i32
  }
  func.func @transform_5(%arg0: i32) -> (i32, i32) {
    %c0_i32 = arith.constant 0 : i32
    %c0_i32_0 = arith.constant 0 : i32
    %c0_i32_1 = arith.constant 0 : i32
    return %c0_i32, %c0_i32_0 : i32, i32
  }
  func.func @transform_6(%arg0: i32) -> (i32, i32) {
    %c0_i32 = arith.constant 0 : i32
    %c0_i32_0 = arith.constant 0 : i32
    %c0_i32_1 = arith.constant 0 : i32
    return %c0_i32, %c0_i32_0 : i32, i32
  }
  func.func @transform_7(%arg0: i32) -> (i32, i32) {
    %c0_i32 = arith.constant 0 : i32
    %c0_i32_0 = arith.constant 0 : i32
    return %c0_i32, %arg0 : i32, i32
  }
}

</mosaic_0001>

<llo_original>
// kernel: actor_forward.1
$region0: #{actor_forward.1}
  #allocation0 [shape = 'u32[]', space=smem, size = 0x4, offset = 0x4, fixed_abs, tag = 'smem constant byte address 0x4 - core index']
  #allocation1 [shape = 'u32[144,128]{1,0:T(1,128)}', space=vmem, size = 0x12000, scoped, tag = 'internal scratch']
  %s0 = inlined_call_operand.vmem [shape: bf16[8,32], index: 0, kind: input, shape index: {}]
  %s1 = inlined_call_operand.vmem [shape: bf16[32,128], index: 1, kind: input, shape index: {}]
  %s2 = inlined_call_operand.vmem [shape: f32[1,128], index: 2, kind: input, shape index: {}]
  %s3 = inlined_call_operand.hbm [shape: bf16[128,128], index: 3, kind: input, shape index: {}]
  %s4 = inlined_call_operand.vmem [shape: f32[1,128], index: 4, kind: input, shape index: {}]
  %s5 = inlined_call_operand.vmem [shape: bf16[8,128], index: 5, kind: input, shape index: {}]
  %s6 = inlined_call_operand.vmem [shape: f32[8,1], index: 6, kind: input, shape index: {}]
  %s7 = inlined_call_operand.vmem [shape: f32[8,8], index: 7, kind: output, shape index: {}]
  %s8 = sld [smem:[#allocation0]]
  $region42: #{actor_forward.1} parent=0
    _
  %s10 = ssub.s32 1, %s8
  %s11 = scalar_select 0, %s10, %s8
  $region1: #{actor_forward.1} parent=0
    #allocation2 [shape = 'u8[32768]{0}', space=vmem, size = 0x8000, scoped, tag = 'input window, operand 3, single buffered']
    #allocation3 [shape = 's32[1]{0}', space=sflag, size = 0x4, scoped, tag = 'scoped memory for actor_forward.1']
    %12 = vsyncpa [#allocation3], 0
    // Predicated region
    $region2: #{actor_forward.1} parent=1 // pred_check
      _
    $region3: #{actor_forward.1} parent=1 // pred_check_branch
      %14 = sbr.rel (0) target = $region5
    $region4: #{actor_forward.1} parent=1 // pred_region
      _
    $region5: #{actor_forward.1} parent=1 // pred_fallthru
      _
    // Predicated region
    $region6: #{actor_forward.1} parent=1 // pred_check
      _
    $region7: #{actor_forward.1} parent=1 // pred_check_branch
      %16 = sbr.rel (0) target = $region9
    $region8: #{actor_forward.1} parent=1 // pred_region
      _
    $region9: #{actor_forward.1} parent=1 // pred_fallthru
      _
    // Predicated region
    $region10: #{actor_forward.1} parent=1 // pred_check
      _
    $region11: #{actor_forward.1} parent=1 // pred_check_branch
      %18 = sbr.rel (0) target = $region13
    $region12: #{actor_forward.1} parent=1 // pred_region
      _
    $region13: #{actor_forward.1} parent=1 // pred_fallthru
      _
    // Predicated region
    $region14: #{actor_forward.1} parent=1 // pred_check
      _
    $region15: #{actor_forward.1} parent=1 // pred_check_branch
      %20 = sbr.rel (0) target = $region17
    $region16: #{actor_forward.1} parent=1 // pred_region
      %s22 = ssub.s32 1024, 1024
      %23 = vsyncadd [#allocation3], %s22
      %s24 = sshll.u32 [#allocation2], 4
      %s25 = int_to_ptr.vmem [resolvable:$true] %s24
      %30 = dma.hbm_to_vmem [thread:$0]  %s3, 1024, %s25, [#allocation3], 64, 64, 4
    $region17: #{actor_forward.1} parent=1 // pred_fallthru
      _
    // Predicated region
    $region18: #{actor_forward.1} parent=1 // pred_check
      _
    $region19: #{actor_forward.1} parent=1 // pred_check_branch
      %32 = sbr.rel (0) target = $region21
    $region20: #{actor_forward.1} parent=1 // pred_region
      _
    $region21: #{actor_forward.1} parent=1 // pred_fallthru
      _
    // Predicated region
    $region22: #{actor_forward.1} parent=1 // pred_check
      _
    $region23: #{actor_forward.1} parent=1 // pred_check_branch
      %34 = sbr.rel (0) target = $region25
    $region24: #{actor_forward.1} parent=1 // pred_region
      _
    $region25: #{actor_forward.1} parent=1 // pred_fallthru
      _
    // Predicated region
    $region26: #{actor_forward.1} parent=1 // pred_check
      _
    $region27: #{actor_forward.1} parent=1 // pred_check_branch
      %36 = sbr.rel (0) target = $region29
    $region28: #{actor_forward.1} parent=1 // pred_region
      _
    $region29: #{actor_forward.1} parent=1 // pred_fallthru
      _
    // Predicated region
    $region30: #{actor_forward.1} parent=1 // pred_check
      _
    $region31: #{actor_forward.1} parent=1 // pred_check_branch
      %38 = sbr.rel (0) target = $region33
    $region32: #{actor_forward.1} parent=1 // pred_region
      %39 = dma.done [#allocation3], 1024
    $region33: #{actor_forward.1} parent=1 // pred_fallthru
      _
    %v41 = vld [vmem:[%s0] sm:$0xf]
    %v42 = vld [vmem:[%s1] sm:$0xf]
    %v43 = vld [vmem:[%s1 + $0x4] sm:$0xf]
    %v44 = vld [vmem:[%s1 + $0x8] sm:$0xf]
    %v45 = vld [vmem:[%s1 + $0xc] sm:$0xf]
    %v46 = vld [vmem:[%s2] sm:$0x1]
    %v48 = vlaneseq
    %v49 = vshrl.u32 %v48, 7
    %v50 = vsub.s32 0, %v49
    %v51 = vrot.slane %v46, %v50
    %v57 = vunpack.c.l.b16 %v42
    %v58 = vunpack.c.l.b16 %v43
    %v59 = vunpack.c.l.b16 %v44
    %v60 = vunpack.c.l.b16 %v45
    %v61 = vpack.c.b16 %v58, %v57
    %v62 = vpack.c.b16 %v60, %v59
    %vm65 = vcmask 261120
    %v67 = vsel %vm65, %v41, 0
    %69 = vmatprep.subr.bf16.mxu0 0
    %70 = vmatpush1.bf16.msra.mxu0 0
    %71 = vmatprep.subr.bf16.mxu0 0
    %72 = vmatpush1.bf16.msra.mxu0 0
    %73 = vmatprep.subr.bf16.mxu0 0
    %74 = vmatpush1.bf16.msra.mxu0 0
    %75 = vmatprep.subr.bf16.mxu0 0
    %76 = vmatpush1.bf16.msra.mxu0 0
    %77 = vmatprep.subr.bf16.mxu0 0
    %78 = vmatpush1.bf16.msra.mxu0 0
    %79 = vmatprep.subr.bf16.mxu0 0
    %80 = vmatpush1.bf16.msra.mxu0 0
    %81 = vmatprep.subr.bf16.mxu0 0
    %82 = vmatpush1.bf16.msra.mxu0 %v62
    %83 = vmatprep.subr.bf16.mxu0 0
    %84 = vmatpush1.bf16.msra.mxu0 %v61
    %85 = vmatprep.subr.bf16.mxu0 0
    %86 = vmatpush2.bf16.msra.mxu0 0
    %87 = vmatprep.subr.bf16.mxu0 0
    %88 = vmatpush2.bf16.msra.mxu0 0
    %89 = vmatprep.subr.bf16.mxu0 0
    %90 = vmatpush2.bf16.msra.mxu0 0
    %91 = vmatprep.subr.bf16.mxu0 0
    %92 = vmatpush2.bf16.msra.mxu0 0
    %93 = vmatprep.subr.bf16.mxu0 0
    %94 = vmatpush2.bf16.msra.mxu0 0
    %95 = vmatprep.subr.bf16.mxu0 0
    %96 = vmatpush2.bf16.msra.mxu0 0
    %97 = vmatprep.subr.bf16.mxu0 0
    %98 = vmatpush2.bf16.msra.mxu0 0
    %99 = vmatprep.subr.bf16.mxu0 0
    %100 = vmatpush2.bf16.msra.mxu0 0
    %101 = vmatprep.mubr.bf16.mxu0 0
    %102 = vmatmul.mubr.bf16.gmra.mxu0 %v67
    %v103 = vpop.f32.mrf.mxu0
    %v104 = vadd.f32 %v51, %v103
    %v105 = vpop.f32.mrf.mxu0
    %v106 = vpop.f32.mrf.mxu0
    %v107 = vpop.f32.mrf.mxu0
    %108 = vdwg.mxu0
    %v109 = vmax.f32 %v104, 0.0
    %v110 = vpack.c.bf16 %v109, %v109
    %v111 = vld [vmem:[#allocation2] sm:$0xf]
    %v112 = vld [vmem:[#allocation2 + $0x4] sm:$0xf]
    %v113 = vld [vmem:[#allocation2 + $0x8] sm:$0xf]
    %v114 = vld [vmem:[#allocation2 + $0xc] sm:$0xf]
    %v115 = vld [vmem:[#allocation2 + $0x10] sm:$0xf]
    %v116 = vld [vmem:[#allocation2 + $0x14] sm:$0xf]
    %v117 = vld [vmem:[#allocation2 + $0x18] sm:$0xf]
    %v118 = vld [vmem:[#allocation2 + $0x1c] sm:$0xf]
    %v119 = vld [vmem:[#allocation2 + $0x20] sm:$0xf]
    %v120 = vld [vmem:[#allocation2 + $0x24] sm:$0xf]
    %v121 = vld [vmem:[#allocation2 + $0x28] sm:$0xf]
    %v122 = vld [vmem:[#allocation2 + $0x2c] sm:$0xf]
    %v123 = vld [vmem:[#allocation2 + $0x30] sm:$0xf]
    %v124 = vld [vmem:[#allocation2 + $0x34] sm:$0xf]
    %v125 = vld [vmem:[#allocation2 + $0x38] sm:$0xf]
    %v126 = vld [vmem:[#allocation2 + $0x3c] sm:$0xf]
    %v127 = vld [vmem:[%s4] sm:$0x1]
    %v129 = vlaneseq
    %v130 = vshrl.u32 %v129, 7
    %v131 = vsub.s32 0, %v130
    %v132 = vrot.slane %v127, %v131
    %v150 = vunpack.c.l.b16 %v111
    %v151 = vunpack.c.l.b16 %v112
    %v152 = vunpack.c.l.b16 %v113
    %v153 = vunpack.c.l.b16 %v114
    %v154 = vunpack.c.l.b16 %v115
    %v155 = vunpack.c.l.b16 %v116
    %v156 = vunpack.c.l.b16 %v117
    %v157 = vunpack.c.l.b16 %v118
    %v158 = vunpack.c.l.b16 %v119
    %v159 = vunpack.c.l.b16 %v120
    %v160 = vunpack.c.l.b16 %v121
    %v161 = vunpack.c.l.b16 %v122
    %v162 = vunpack.c.l.b16 %v123
    %v163 = vunpack.c.l.b16 %v124
    %v164 = vunpack.c.l.b16 %v125
    %v165 = vunpack.c.l.b16 %v126
    %v166 = vpack.c.b16 %v151, %v150
    %v167 = vpack.c.b16 %v153, %v152
    %v168 = vpack.c.b16 %v155, %v154
    %v169 = vpack.c.b16 %v157, %v156
    %v170 = vpack.c.b16 %v159, %v158
    %v171 = vpack.c.b16 %v161, %v160
    %v172 = vpack.c.b16 %v163, %v162
    %v173 = vpack.c.b16 %v165, %v164
    %182 = vmatprep.subr.bf16.mxu0 0
    %183 = vmatpush1.bf16.msra.mxu0 %v173
    %184 = vmatprep.subr.bf16.mxu0 0
    %185 = vmatpush1.bf16.msra.mxu0 %v172
    %186 = vmatprep.subr.bf16.mxu0 0
    %187 = vmatpush1.bf16.msra.mxu0 %v171
    %188 = vmatprep.subr.bf16.mxu0 0
    %189 = vmatpush1.bf16.msra.mxu0 %v170
    %190 = vmatprep.subr.bf16.mxu0 0
    %191 = vmatpush1.bf16.msra.mxu0 %v169
    %192 = vmatprep.subr.bf16.mxu0 0
    %193 = vmatpush1.bf16.msra.mxu0 %v168
    %194 = vmatprep.subr.bf16.mxu0 0
    %195 = vmatpush1.bf16.msra.mxu0 %v167
    %196 = vmatprep.subr.bf16.mxu0 0
    %197 = vmatpush1.bf16.msra.mxu0 %v166
    %198 = vmatprep.subr.bf16.mxu0 0
    %199 = vmatpush2.bf16.msra.mxu0 0
    %200 = vmatprep.subr.bf16.mxu0 0
    %201 = vmatpush2.bf16.msra.mxu0 0
    %202 = vmatprep.subr.bf16.mxu0 0
    %203 = vmatpush2.bf16.msra.mxu0 0
    %204 = vmatprep.subr.bf16.mxu0 0
    %205 = vmatpush2.bf16.msra.mxu0 0
    %206 = vmatprep.subr.bf16.mxu0 0
    %207 = vmatpush2.bf16.msra.mxu0 0
    %208 = vmatprep.subr.bf16.mxu0 0
    %209 = vmatpush2.bf16.msra.mxu0 0
    %210 = vmatprep.subr.bf16.mxu0 0
    %211 = vmatpush2.bf16.msra.mxu0 0
    %212 = vmatprep.subr.bf16.mxu0 0
    %213 = vmatpush2.bf16.msra.mxu0 0
    %214 = vmatprep.mubr.bf16.mxu0 0
    %215 = vmatmul.mubr.bf16.gmra.mxu0 %v110
    %v216 = vpop.f32.mrf.mxu0
    %v217 = vadd.f32 %v132, %v216
    %v218 = vpop.f32.mrf.mxu0
    %v219 = vpop.f32.mrf.mxu0
    %v220 = vpop.f32.mrf.mxu0
    %221 = vdwg.mxu0
    %v222 = vmax.f32 %v217, 0.0
    %v223 = vld [vmem:[%s5] sm:$0xf]
    %v224 = vpack.c.bf16 %v222, %v222
    %v225 = vld [vmem:[%s6] sm:$0xff]
    %227 = vset.pattern.permute.xlu0 0
    %228 = vperm.xlu0 %227, %v225
    %v229 = vpop.permute.xlu0 %228
    %231 = vmatprep.subr.bf16.mxu0 0
    %232 = vmatpush1.bf16.xpose.msra.mxu0 0
    %233 = vmatprep.subr.bf16.mxu0 0
    %234 = vmatpush1.bf16.xpose.msra.mxu0 0
    %235 = vmatprep.subr.bf16.mxu0 0
    %236 = vmatpush1.bf16.xpose.msra.mxu0 0
    %237 = vmatprep.subr.bf16.mxu0 0
    %238 = vmatpush1.bf16.xpose.msra.mxu0 0
    %239 = vmatprep.subr.bf16.mxu0 0
    %240 = vmatpush1.bf16.xpose.msra.mxu0 0
    %241 = vmatprep.subr.bf16.mxu0 0
    %242 = vmatpush1.bf16.xpose.msra.mxu0 0
    %243 = vmatprep.subr.bf16.mxu0 0
    %244 = vmatpush1.bf16.xpose.msra.mxu0 0
    %245 = vmatprep.subr.bf16.mxu0 0
    %246 = vmatpush1.bf16.xpose.msra.mxu0 %v224
    %247 = vmatprep.subr.bf16.mxu0 0
    %248 = vmatpush2.bf16.xpose.msra.mxu0 0
    %249 = vmatprep.subr.bf16.mxu0 0
    %250 = vmatpush2.bf16.xpose.msra.mxu0 0
    %251 = vmatprep.subr.bf16.mxu0 0
    %252 = vmatpush2.bf16.xpose.msra.mxu0 0
    %253 = vmatprep.subr.bf16.mxu0 0
    %254 = vmatpush2.bf16.xpose.msra.mxu0 0
    %255 = vmatprep.subr.bf16.mxu0 0
    %256 = vmatpush2.bf16.xpose.msra.mxu0 0
    %257 = vmatprep.subr.bf16.mxu0 0
    %258 = vmatpush2.bf16.xpose.msra.mxu0 0
    %259 = vmatprep.subr.bf16.mxu0 0
    %260 = vmatpush2.bf16.xpose.msra.mxu0 0
    %261 = vmatprep.subr.bf16.mxu0 0
    %262 = vmatpush2.bf16.xpose.msra.mxu0 0
    %263 = vmatprep.mubr.bf16.mxu0 0
    %264 = vmatmul.mubr.bf16.gmra.mxu0 %v223
    %v265 = vpop.f32.mrf.mxu0
    %v266 = vadd.f32 %v229, %v265
    %v267 = vpop.f32.mrf.mxu0
    %v268 = vpop.f32.mrf.mxu0
    %v269 = vpop.f32.mrf.mxu0
    %270 = vdwg.mxu0
    %v271 = vtanh.pop %v266
    %vm272 = vcmask 64512
    %273 = vst.msk [vmem:[%s7] sm:$0xff] %vm272, %v271
    // Predicated region
    $region34: #{actor_forward.1} parent=1 // pred_check
      _
    $region35: #{actor_forward.1} parent=1 // pred_check_branch
      %275 = sbr.rel (0) target = $region37
    $region36: #{actor_forward.1} parent=1 // pred_region
      _
    $region37: #{actor_forward.1} parent=1 // pred_fallthru
      _
    // Predicated region
    $region38: #{actor_forward.1} parent=1 // pred_check
      _
    $region39: #{actor_forward.1} parent=1 // pred_check_branch
      %277 = sbr.rel (0) target = $region41
    $region40: #{actor_forward.1} parent=1 // pred_region
      _
    $region41: #{actor_forward.1} parent=1 // pred_fallthru
      _
    %278 = vsyncpa [#allocation3], 1

</llo_original>
